<compile_context>
chip_gen: v6e
topology: v6e:2x2x1
jax: 0.10.0
libtpu: 0.0.40
codegen_flags: <defaults>
</compile_context>

<pallas_src>
import functools
import math

import jax
import jax.numpy as jnp
from jax.experimental import pallas as pl
from jax.experimental.pallas import tpu as pltpu


def _round_up(x, m):
    return (x + m - 1) // m * m


# ---------------------------------------------------------------------------
# Pallas kernel: fused 4-layer MLP (one TM-row tile per grid step)
# ---------------------------------------------------------------------------
def _transition_mlp_kernel(
    xh_ref,             # (TM, H)   f32   hidden part of the input
    xa_ref,             # (TM, A)   f32   action part of the input
    w1h_ref, w1a_ref,   # (H, 128), (A, 128)   bf16   (W1 split along K)
    b1_ref,             # (1, 128)  f32
    w2_ref, b2_ref,     # (128, 128) bf16, (1, 128) f32
    w3_ref, b3_ref,     # (128, 128) bf16, (1, 128) f32
    w4_ref, b4_ref,     # (128, Hp) bf16, (1, Hp)  f32
    o_ref,              # (TM, Hp)  f32
):
    xh = xh_ref[...].astype(jnp.bfloat16)
    xa = xa_ref[...].astype(jnp.bfloat16)

    # Layer 1: split-K matmul replaces the concat([prev_hidden, action], -1).
    h = jnp.dot(xh, w1h_ref[...], preferred_element_type=jnp.float32)
    h += jnp.dot(xa, w1a_ref[...], preferred_element_type=jnp.float32)
    h += b1_ref[...]
    h = jnp.maximum(h, 0.0)

    h = jnp.dot(h.astype(jnp.bfloat16), w2_ref[...],
                preferred_element_type=jnp.float32) + b2_ref[...]
    h = jnp.maximum(h, 0.0)

    h = jnp.dot(h.astype(jnp.bfloat16), w3_ref[...],
                preferred_element_type=jnp.float32) + b3_ref[...]
    h = jnp.maximum(h, 0.0)

    h = jnp.dot(h.astype(jnp.bfloat16), w4_ref[...],
                preferred_element_type=jnp.float32) + b4_ref[...]

    o_ref[...] = h.astype(o_ref.dtype)


# ---------------------------------------------------------------------------
# Wrapper
# ---------------------------------------------------------------------------
@functools.partial(jax.jit, static_argnames=("block_rows",))
def transition_model_forward(prev_hidden, action, params, block_rows=1024):
    """Pallas implementation of TransitionModel.forward.

    prev_hidden: [trajlen, batch, hidden_size]   (f32)
    action:      [trajlen, batch, action_size]   (f32)
    params:      [(w1,b1),(w2,b2),(w3,b3),(w4,b4)], w: (in, out), b: (1, out)
    returns:     [trajlen, batch, hidden_size]   (f32)
    """
    (w1, b1), (w2, b2), (w3, b3), (w4, b4) = params

    T, B, H = prev_hidden.shape
    A = action.shape[-1]
    M = T * B

    xh = prev_hidden.reshape(M, H).astype(jnp.float32)
    xa = action.reshape(M, A).astype(jnp.float32)

    # Split W1 along K into (hidden part, action part); bf16 for the MXU.
    w1h = w1[:H].astype(jnp.bfloat16)
    w1a = w1[H:].astype(jnp.bfloat16)
    w2b = w2.astype(jnp.bfloat16)
    w3b = w3.astype(jnp.bfloat16)
    w4b = w4.astype(jnp.bfloat16)
    b1f, b2f, b3f, b4f = (b.astype(jnp.float32) for b in (b1, b2, b3, b4))

    # Lane-dense output: pad the last-layer N (hidden_size) to a multiple of 128.
    Hp = _round_up(H, 128)
    if Hp != H:
        w4b = jnp.pad(w4b, ((0, 0), (0, Hp - H)))
        b4f = jnp.pad(b4f, ((0, 0), (0, Hp - H)))

    # Row tiling: TM rows per grid step (multiple of 16 for bf16 sublane packing).
    TM = _round_up(min(block_rows, M), 16)
    Mp = _round_up(M, TM)
    if Mp != M:
        xh = jnp.pad(xh, ((0, Mp - M), (0, 0)))
        xa = jnp.pad(xa, ((0, Mp - M), (0, 0)))

    grid = (Mp // TM,)
    row = lambda i: (i, 0)        # streaming activations / output
    pinned = lambda i: (0, 0)     # weights & biases stay resident in VMEM

    out2d = pl.pallas_call(
        _transition_mlp_kernel,
        out_shape=jax.ShapeDtypeStruct((Mp, Hp), jnp.float32),
        grid=grid,
        in_specs=[
            pl.BlockSpec((TM, H), row),        # xh
            pl.BlockSpec((TM, A), row),        # xa
            pl.BlockSpec((H, 128), pinned),    # w1_h
            pl.BlockSpec((A, 128), pinned),    # w1_a
            pl.BlockSpec((1, 128), pinned),    # b1
            pl.BlockSpec((128, 128), pinned),  # w2
            pl.BlockSpec((1, 128), pinned),    # b2
            pl.BlockSpec((128, 128), pinned),  # w3
            pl.BlockSpec((1, 128), pinned),    # b3
            pl.BlockSpec((128, Hp), pinned),   # w4 (N padded to 128-lane multiple)
            pl.BlockSpec((1, Hp), pinned),     # b4
        ],
        out_specs=pl.BlockSpec((TM, Hp), row),
        compiler_params=pltpu.CompilerParams(
            dimension_semantics=("parallel",)),
    )(xh, xa, w1h, w1a, b1f, w2b, b2f, w3b, b3f, w4b, b4f)

    return out2d[:M, :H].reshape(T, B, H)


# ---------------------------------------------------------------------------
# Deterministic parameter init (matches nn.Linear's U(-1/sqrt(fan_in), ...))
# Weights stored (in_features, out_features), i.e. transposed vs. PyTorch.
# ---------------------------------------------------------------------------
def init_params(key, hidden_size, action_size):
    dims = [
        (hidden_size + action_size, 128),
        (128, 128),
        (128, 128),
        (128, hidden_size),
    ]
    params = []
    for fan_in, fan_out in dims:
        key, kw, kb = jax.random.split(key, 3)
        bound = 1.0 / math.sqrt(fan_in)
        w = jax.random.uniform(kw, (fan_in, fan_out), jnp.float32, -bound, bound)
        b = jax.random.uniform(kb, (1, fan_out), jnp.float32, -bound, bound)
        params.append((w, b))
    return params


# ---------------------------------------------------------------------------
# Pure-JAX reference (same bf16-input / f32-accumulation numerics)
# ---------------------------------------------------------------------------
def reference_forward(prev_hidden, action, params):
    (w1, b1), (w2, b2), (w3, b3), (w4, b4) = params
    x = jnp.concatenate([prev_hidden, action], axis=-1).astype(jnp.bfloat16)
    w1b, w2b, w3b, w4b = (w.astype(jnp.bfloat16) for w in (w1, w2, w3, w4))
    h = jnp.maximum(jnp.dot(x, w1b, preferred_element_type=jnp.float32) + b1[0], 0.0)
    h = jnp.maximum(jnp.dot(h.astype(jnp.bfloat16), w2b,
                            preferred_element_type=jnp.float32) + b2[0], 0.0)
    h = jnp.maximum(jnp.dot(h.astype(jnp.bfloat16), w3b,
                            preferred_element_type=jnp.float32) + b3[0], 0.0)
    h = jnp.dot(h.astype(jnp.bfloat16), w4b,
                preferred_element_type=jnp.float32) + b4[0]
    return h


if __name__ == "__main__":
    trajlen, batchsize = 8, 2
    hidden_size, action_size = 32, 4

    key = jax.random.PRNGKey(0)
    k_params, k_h, k_a = jax.random.split(key, 3)

    params = init_params(k_params, hidden_size, action_size)
    prev_hidden = jax.random.normal(k_h, (trajlen, batchsize, hidden_size), jnp.float32)
    action = jax.random.normal(k_a, (trajlen, batchsize, action_size), jnp.float32)

    out = transition_model_forward(prev_hidden, action, params)
    out = jax.block_until_ready(out)
    ref = reference_forward(prev_hidden, action, params)
    assert out.shape == (trajlen, batchsize, hidden_size), out.shape
    assert jnp.allclose(out, ref, atol=2e-2, rtol=2e-2), "mismatch vs reference (small)"

    # Larger shape that exercises the multi-step grid and row/lane padding paths.
    T2, B2 = 65, 33  # M = 2145 -> padded to 3*1024, grid=(3,)
    k_h2, k_a2 = jax.random.split(jax.random.PRNGKey(1))
    ph2 = jax.random.normal(k_h2, (T2, B2, hidden_size), jnp.float32)
    ac2 = jax.random.normal(k_a2, (T2, B2, action_size), jnp.float32)
    out2 = jax.block_until_ready(transition_model_forward(ph2, ac2, params))
    ref2 = reference_forward(ph2, ac2, params)
    assert out2.shape == (T2, B2, hidden_size), out2.shape
    assert jnp.allclose(out2, ref2, atol=2e-2, rtol=2e-2), "mismatch vs reference (large)"

    print("KERNEL_OK")
</pallas_src>

<mosaic_0001>
module attributes {stable_mosaic.version = 11 : i64} {
  func.func @_transition_mlp_kernel(%arg0: i32, %arg1: memref<16x32xf32, #tpu.memory_space<vmem>>, %arg2: memref<16x4xf32, #tpu.memory_space<vmem>>, %arg3: memref<32x128xbf16, #tpu.memory_space<vmem>>, %arg4: memref<4x128xbf16, #tpu.memory_space<vmem>>, %arg5: memref<1x128xf32, #tpu.memory_space<vmem>>, %arg6: memref<128x128xbf16, #tpu.memory_space<vmem>>, %arg7: memref<1x128xf32, #tpu.memory_space<vmem>>, %arg8: memref<128x128xbf16, #tpu.memory_space<vmem>>, %arg9: memref<1x128xf32, #tpu.memory_space<vmem>>, %arg10: memref<128x128xbf16, #tpu.memory_space<vmem>>, %arg11: memref<1x128xf32, #tpu.memory_space<vmem>>, %arg12: memref<16x128xf32, #tpu.memory_space<vmem>>) attributes {dimension_semantics = [#tpu.dimension_semantics<parallel>], iteration_bounds = array<i64: 1>, scalar_prefetch = 0 : i64, scratch_operands = 0 : i64, tpu.core_type = #tpu.core_type<tc>, window_params = [{transform_indices = @transform_0, window_bounds = array<i64: 16, 32>}, {transform_indices = @transform_1, window_bounds = array<i64: 16, 4>}, {pipeline_mode = #tpu.pipeline_mode<synchronous>, transform_indices = @transform_2, window_bounds = array<i64: 32, 128>}, {pipeline_mode = #tpu.pipeline_mode<synchronous>, transform_indices = @transform_3, window_bounds = array<i64: 4, 128>}, {pipeline_mode = #tpu.pipeline_mode<synchronous>, transform_indices = @transform_4, window_bounds = array<i64: 1, 128>}, {pipeline_mode = #tpu.pipeline_mode<synchronous>, transform_indices = @transform_5, window_bounds = array<i64: 128, 128>}, {pipeline_mode = #tpu.pipeline_mode<synchronous>, transform_indices = @transform_6, window_bounds = array<i64: 1, 128>}, {pipeline_mode = #tpu.pipeline_mode<synchronous>, transform_indices = @transform_7, window_bounds = array<i64: 128, 128>}, {pipeline_mode = #tpu.pipeline_mode<synchronous>, transform_indices = @transform_8, window_bounds = array<i64: 1, 128>}, {pipeline_mode = #tpu.pipeline_mode<synchronous>, transform_indices = @transform_9, window_bounds = array<i64: 128, 128>}, {pipeline_mode = #tpu.pipeline_mode<synchronous>, transform_indices = @transform_10, window_bounds = array<i64: 1, 128>}, {transform_indices = @transform_11, window_bounds = array<i64: 16, 128>}]} {
    %c0 = arith.constant 0 : index
    %c0_0 = arith.constant 0 : index
    %0 = vector.load %arg1[%c0, %c0_0] : memref<16x32xf32, #tpu.memory_space<vmem>>, vector<16x32xf32>
    %1 = arith.truncf %0 : vector<16x32xf32> to vector<16x32xbf16>
    %c0_1 = arith.constant 0 : index
    %c0_2 = arith.constant 0 : index
    %2 = vector.load %arg2[%c0_1, %c0_2] : memref<16x4xf32, #tpu.memory_space<vmem>>, vector<16x4xf32>
    %3 = arith.truncf %2 : vector<16x4xf32> to vector<16x4xbf16>
    %c0_3 = arith.constant 0 : index
    %c0_4 = arith.constant 0 : index
    %4 = vector.load %arg3[%c0_3, %c0_4] : memref<32x128xbf16, #tpu.memory_space<vmem>>, vector<32x128xbf16>
    %cst = arith.constant dense<0.000000e+00> : vector<16x128xf32>
    %5 = tpu.matmul %1, %4, %cst {dimension_numbers = #tpu.dot_dimension_numbers<[1], [0], [0], [1], [0, 0, 1, 1], [], []>} : vector<16x32xbf16>, vector<32x128xbf16>, vector<16x128xf32> -> vector<16x128xf32>
    %c0_5 = arith.constant 0 : index
    %c0_6 = arith.constant 0 : index
    %6 = vector.load %arg4[%c0_5, %c0_6] : memref<4x128xbf16, #tpu.memory_space<vmem>>, vector<4x128xbf16>
    %cst_7 = arith.constant dense<0.000000e+00> : vector<16x128xf32>
    %7 = tpu.matmul %3, %6, %cst_7 {dimension_numbers = #tpu.dot_dimension_numbers<[1], [0], [0], [1], [0, 0, 1, 1], [], []>} : vector<16x4xbf16>, vector<4x128xbf16>, vector<16x128xf32> -> vector<16x128xf32>
    %8 = arith.addf %5, %7 : vector<16x128xf32>
    %c0_8 = arith.constant 0 : index
    %c0_9 = arith.constant 0 : index
    %9 = vector.load %arg5[%c0_8, %c0_9] : memref<1x128xf32, #tpu.memory_space<vmem>>, vector<1x128xf32>
    %10 = vector.broadcast %9 : vector<1x128xf32> to vector<16x128xf32>
    %11 = arith.addf %8, %10 : vector<16x128xf32>
    %cst_10 = arith.constant 0.000000e+00 : f32
    %12 = vector.broadcast %cst_10 : f32 to vector<16x128xf32>
    %13 = arith.maximumf %11, %12 : vector<16x128xf32>
    %14 = arith.truncf %13 : vector<16x128xf32> to vector<16x128xbf16>
    %c0_11 = arith.constant 0 : index
    %c0_12 = arith.constant 0 : index
    %15 = vector.load %arg6[%c0_11, %c0_12] : memref<128x128xbf16, #tpu.memory_space<vmem>>, vector<128x128xbf16>
    %cst_13 = arith.constant dense<0.000000e+00> : vector<16x128xf32>
    %16 = tpu.matmul %14, %15, %cst_13 {dimension_numbers = #tpu.dot_dimension_numbers<[1], [0], [0], [1], [0, 0, 1, 1], [], []>} : vector<16x128xbf16>, vector<128x128xbf16>, vector<16x128xf32> -> vector<16x128xf32>
    %c0_14 = arith.constant 0 : index
    %c0_15 = arith.constant 0 : index
    %17 = vector.load %arg7[%c0_14, %c0_15] : memref<1x128xf32, #tpu.memory_space<vmem>>, vector<1x128xf32>
    %18 = vector.broadcast %17 : vector<1x128xf32> to vector<16x128xf32>
    %19 = arith.addf %16, %18 : vector<16x128xf32>
    %cst_16 = arith.constant 0.000000e+00 : f32
    %20 = vector.broadcast %cst_16 : f32 to vector<16x128xf32>
    %21 = arith.maximumf %19, %20 : vector<16x128xf32>
    %22 = arith.truncf %21 : vector<16x128xf32> to vector<16x128xbf16>
    %c0_17 = arith.constant 0 : index
    %c0_18 = arith.constant 0 : index
    %23 = vector.load %arg8[%c0_17, %c0_18] : memref<128x128xbf16, #tpu.memory_space<vmem>>, vector<128x128xbf16>
    %cst_19 = arith.constant dense<0.000000e+00> : vector<16x128xf32>
    %24 = tpu.matmul %22, %23, %cst_19 {dimension_numbers = #tpu.dot_dimension_numbers<[1], [0], [0], [1], [0, 0, 1, 1], [], []>} : vector<16x128xbf16>, vector<128x128xbf16>, vector<16x128xf32> -> vector<16x128xf32>
    %c0_20 = arith.constant 0 : index
    %c0_21 = arith.constant 0 : index
    %25 = vector.load %arg9[%c0_20, %c0_21] : memref<1x128xf32, #tpu.memory_space<vmem>>, vector<1x128xf32>
    %26 = vector.broadcast %25 : vector<1x128xf32> to vector<16x128xf32>
    %27 = arith.addf %24, %26 : vector<16x128xf32>
    %cst_22 = arith.constant 0.000000e+00 : f32
    %28 = vector.broadcast %cst_22 : f32 to vector<16x128xf32>
    %29 = arith.maximumf %27, %28 : vector<16x128xf32>
    %30 = arith.truncf %29 : vector<16x128xf32> to vector<16x128xbf16>
    %c0_23 = arith.constant 0 : index
    %c0_24 = arith.constant 0 : index
    %31 = vector.load %arg10[%c0_23, %c0_24] : memref<128x128xbf16, #tpu.memory_space<vmem>>, vector<128x128xbf16>
    %cst_25 = arith.constant dense<0.000000e+00> : vector<16x128xf32>
    %32 = tpu.matmul %30, %31, %cst_25 {dimension_numbers = #tpu.dot_dimension_numbers<[1], [0], [0], [1], [0, 0, 1, 1], [], []>} : vector<16x128xbf16>, vector<128x128xbf16>, vector<16x128xf32> -> vector<16x128xf32>
    %c0_26 = arith.constant 0 : index
    %c0_27 = arith.constant 0 : index
    %33 = vector.load %arg11[%c0_26, %c0_27] : memref<1x128xf32, #tpu.memory_space<vmem>>, vector<1x128xf32>
    %34 = vector.broadcast %33 : vector<1x128xf32> to vector<16x128xf32>
    %35 = arith.addf %32, %34 : vector<16x128xf32>
    %c0_28 = arith.constant 0 : index
    %c0_29 = arith.constant 0 : index
    %36 = vector.load %arg12[%c0_28, %c0_29] : memref<16x128xf32, #tpu.memory_space<vmem>>, vector<16x128xf32>
    tpu.vector_store %arg12[%c0_28, %c0_29], %35 {strides = array<i32>} : memref<16x128xf32, #tpu.memory_space<vmem>>, vector<16x128xf32>,
    return
  }
  func.func @transform_0(%arg0: i32) -> (i32, i32) {
    %c0_i32 = arith.constant 0 : i32
    %c0_i32_0 = arith.constant 0 : i32
    return %arg0, %c0_i32 : i32, i32
  }
  func.func @transform_1(%arg0: i32) -> (i32, i32) {
    %c0_i32 = arith.constant 0 : i32
    %c0_i32_0 = arith.constant 0 : i32
    return %arg0, %c0_i32 : i32, i32
  }
  func.func @transform_2(%arg0: i32) -> (i32, i32) {
    %c0_i32 = arith.constant 0 : i32
    %c0_i32_0 = arith.constant 0 : i32
    %c0_i32_1 = arith.constant 0 : i32
    return %c0_i32, %c0_i32_0 : i32, i32
  }
  func.func @transform_3(%arg0: i32) -> (i32, i32) {
    %c0_i32 = arith.constant 0 : i32
    %c0_i32_0 = arith.constant 0 : i32
    %c0_i32_1 = arith.constant 0 : i32
    return %c0_i32, %c0_i32_0 : i32, i32
  }
  func.func @transform_4(%arg0: i32) -> (i32, i32) {
    %c0_i32 = arith.constant 0 : i32
    %c0_i32_0 = arith.constant 0 : i32
    %c0_i32_1 = arith.constant 0 : i32
    return %c0_i32, %c0_i32_0 : i32, i32
  }
  func.func @transform_5(%arg0: i32) -> (i32, i32) {
    %c0_i32 = arith.constant 0 : i32
    %c0_i32_0 = arith.constant 0 : i32
    %c0_i32_1 = arith.constant 0 : i32
    return %c0_i32, %c0_i32_0 : i32, i32
  }
  func.func @transform_6(%arg0: i32) -> (i32, i32) {
    %c0_i32 = arith.constant 0 : i32
    %c0_i32_0 = arith.constant 0 : i32
    %c0_i32_1 = arith.constant 0 : i32
    return %c0_i32, %c0_i32_0 : i32, i32
  }
  func.func @transform_7(%arg0: i32) -> (i32, i32) {
    %c0_i32 = arith.constant 0 : i32
    %c0_i32_0 = arith.constant 0 : i32
    %c0_i32_1 = arith.constant 0 : i32
    return %c0_i32, %c0_i32_0 : i32, i32
  }
  func.func @transform_8(%arg0: i32) -> (i32, i32) {
    %c0_i32 = arith.constant 0 : i32
    %c0_i32_0 = arith.constant 0 : i32
    %c0_i32_1 = arith.constant 0 : i32
    return %c0_i32, %c0_i32_0 : i32, i32
  }
  func.func @transform_9(%arg0: i32) -> (i32, i32) {
    %c0_i32 = arith.constant 0 : i32
    %c0_i32_0 = arith.constant 0 : i32
    %c0_i32_1 = arith.constant 0 : i32
    return %c0_i32, %c0_i32_0 : i32, i32
  }
  func.func @transform_10(%arg0: i32) -> (i32, i32) {
    %c0_i32 = arith.constant 0 : i32
    %c0_i32_0 = arith.constant 0 : i32
    %c0_i32_1 = arith.constant 0 : i32
    return %c0_i32, %c0_i32_0 : i32, i32
  }
  func.func @transform_11(%arg0: i32) -> (i32, i32) {
    %c0_i32 = arith.constant 0 : i32
    %c0_i32_0 = arith.constant 0 : i32
    return %arg0, %c0_i32 : i32, i32
  }
}

</mosaic_0001>

<llo_original>
// kernel: transition_model_forward.1
$region0: #{transition_model_forward.1}
  #allocation0 [shape = 'u32[]', space=smem, size = 0x4, offset = 0x4, fixed_abs, tag = 'smem constant byte address 0x4 - core index']
  #allocation1 [shape = 'u32[144,128]{1,0:T(1,128)}', space=vmem, size = 0x12000, scoped, tag = 'internal scratch']
  %s0 = inlined_call_operand.vmem [shape: f32[16,32], index: 0, kind: input, shape index: {}]
  %s1 = inlined_call_operand.vmem [shape: f32[16,4], index: 1, kind: input, shape index: {}]
  %s2 = inlined_call_operand.vmem [shape: bf16[32,128], index: 2, kind: input, shape index: {}]
  %s3 = inlined_call_operand.vmem [shape: bf16[4,128], index: 3, kind: input, shape index: {}]
  %s4 = inlined_call_operand.vmem [shape: f32[1,128], index: 4, kind: input, shape index: {}]
  %s5 = inlined_call_operand.vmem [shape: bf16[128,128], index: 5, kind: input, shape index: {}]
  %s6 = inlined_call_operand.vmem [shape: f32[1,128], index: 6, kind: input, shape index: {}]
  %s7 = inlined_call_operand.vmem [shape: bf16[128,128], index: 7, kind: input, shape index: {}]
  %s8 = inlined_call_operand.vmem [shape: f32[1,128], index: 8, kind: input, shape index: {}]
  %s9 = inlined_call_operand.vmem [shape: bf16[128,128], index: 9, kind: input, shape index: {}]
  %s10 = inlined_call_operand.vmem [shape: f32[1,128], index: 10, kind: input, shape index: {}]
  %s11 = inlined_call_operand.hbm [shape: f32[16,128], index: 11, kind: output, shape index: {}]
  %s12 = sld [smem:[#allocation0]]
  $region54: #{transition_model_forward.1} parent=0
    _
  %s14 = ssub.s32 1, %s12
  %s15 = scalar_select 0, %s14, %s12
  $region1: #{transition_model_forward.1} parent=0
    #allocation2 [shape = 'u8[8192]{0}', space=vmem, size = 0x2000, scoped, tag = 'output window, operand 0, single buffered']
    #allocation3 [shape = 's32[1]{0}', space=sflag, size = 0x4, scoped, tag = 'scoped memory for transition_model_forward.1']
    %16 = vsyncpa [#allocation3], 0
    // Predicated region
    $region2: #{transition_model_forward.1} parent=1 // pred_check
      _
    $region3: #{transition_model_forward.1} parent=1 // pred_check_branch
      %18 = sbr.rel (0) target = $region5
    $region4: #{transition_model_forward.1} parent=1 // pred_region
      _
    $region5: #{transition_model_forward.1} parent=1 // pred_fallthru
      _
    // Predicated region
    $region6: #{transition_model_forward.1} parent=1 // pred_check
      _
    $region7: #{transition_model_forward.1} parent=1 // pred_check_branch
      %20 = sbr.rel (0) target = $region9
    $region8: #{transition_model_forward.1} parent=1 // pred_region
      _
    $region9: #{transition_model_forward.1} parent=1 // pred_fallthru
      _
    // Predicated region
    $region10: #{transition_model_forward.1} parent=1 // pred_check
      _
    $region11: #{transition_model_forward.1} parent=1 // pred_check_branch
      %22 = sbr.rel (0) target = $region13
    $region12: #{transition_model_forward.1} parent=1 // pred_region
      _
    $region13: #{transition_model_forward.1} parent=1 // pred_fallthru
      _
    // Predicated region
    $region14: #{transition_model_forward.1} parent=1 // pred_check
      _
    $region15: #{transition_model_forward.1} parent=1 // pred_check_branch
      %24 = sbr.rel (0) target = $region17
    $region16: #{transition_model_forward.1} parent=1 // pred_region
      _
    $region17: #{transition_model_forward.1} parent=1 // pred_fallthru
      _
    // Predicated region
    $region18: #{transition_model_forward.1} parent=1 // pred_check
      _
    $region19: #{transition_model_forward.1} parent=1 // pred_check_branch
      %26 = sbr.rel (0) target = $region21
    $region20: #{transition_model_forward.1} parent=1 // pred_region
      _
    $region21: #{transition_model_forward.1} parent=1 // pred_fallthru
      _
    // Predicated region
    $region22: #{transition_model_forward.1} parent=1 // pred_check
      _
    $region23: #{transition_model_forward.1} parent=1 // pred_check_branch
      %28 = sbr.rel (0) target = $region25
    $region24: #{transition_model_forward.1} parent=1 // pred_region
      _
    $region25: #{transition_model_forward.1} parent=1 // pred_fallthru
      _
    // Predicated region
    $region26: #{transition_model_forward.1} parent=1 // pred_check
      _
    $region27: #{transition_model_forward.1} parent=1 // pred_check_branch
      %30 = sbr.rel (0) target = $region29
    $region28: #{transition_model_forward.1} parent=1 // pred_region
      _
    $region29: #{transition_model_forward.1} parent=1 // pred_fallthru
      _
    // Predicated region
    $region30: #{transition_model_forward.1} parent=1 // pred_check
      _
    $region31: #{transition_model_forward.1} parent=1 // pred_check_branch
      %32 = sbr.rel (0) target = $region33
    $region32: #{transition_model_forward.1} parent=1 // pred_region
      _
    $region33: #{transition_model_forward.1} parent=1 // pred_fallthru
      _
    // Predicated region
    $region34: #{transition_model_forward.1} parent=1 // pred_check
      _
    $region35: #{transition_model_forward.1} parent=1 // pred_check_branch
      %34 = sbr.rel (0) target = $region37
    $region36: #{transition_model_forward.1} parent=1 // pred_region
      _
    $region37: #{transition_model_forward.1} parent=1 // pred_fallthru
      _
    // Predicated region
    $region38: #{transition_model_forward.1} parent=1 // pred_check
      _
    $region39: #{transition_model_forward.1} parent=1 // pred_check_branch
      %36 = sbr.rel (0) target = $region41
    $region40: #{transition_model_forward.1} parent=1 // pred_region
      _
    $region41: #{transition_model_forward.1} parent=1 // pred_fallthru
      _
    // Predicated region
    $region42: #{transition_model_forward.1} parent=1 // pred_check
      _
    $region43: #{transition_model_forward.1} parent=1 // pred_check_branch
      %38 = sbr.rel (0) target = $region45
    $region44: #{transition_model_forward.1} parent=1 // pred_region
      _
    $region45: #{transition_model_forward.1} parent=1 // pred_fallthru
      _
    %v40 = vld [vmem:[%s0] sm:$0xff]
    %v41 = vld [vmem:[%s0 + $0x8] sm:$0xff]
    %v42 = vpack.c.bf16 %v41, %v40
    %v43 = vld [vmem:[%s1] sm:$0xff]
    %v44 = vld [vmem:[%s1 + $0x8] sm:$0xff]
    %v45 = vpack.c.bf16 %v44, %v43
    %v46 = vld [vmem:[%s2] sm:$0xf]
    %v47 = vld [vmem:[%s2 + $0x4] sm:$0xf]
    %v48 = vld [vmem:[%s2 + $0x8] sm:$0xf]
    %v49 = vld [vmem:[%s2 + $0xc] sm:$0xf]
    %v50 = vld [vmem:[%s3] sm:$0x3]
    %vm51 = vcmask 31744
    %v53 = vsel %vm51, %v45, 0
    %vm55 = vcmask 1041408
    %v57 = vsel %vm55, %v50, 0
    %59 = vmatprep.subr.bf16.mxu0 0
    %60 = vmatpush1.bf16.msra.mxu0 0
    %61 = vmatprep.subr.bf16.mxu0 0
    %62 = vmatpush1.bf16.msra.mxu0 0
    %63 = vmatprep.subr.bf16.mxu0 0
    %64 = vmatpush1.bf16.msra.mxu0 0
    %65 = vmatprep.subr.bf16.mxu0 0
    %66 = vmatpush1.bf16.msra.mxu0 0
    %67 = vmatprep.subr.bf16.mxu0 0
    %68 = vmatpush1.bf16.msra.mxu0 0
    %69 = vmatprep.subr.bf16.mxu0 0
    %70 = vmatpush1.bf16.msra.mxu0 0
    %71 = vmatprep.subr.bf16.mxu0 0
    %72 = vmatpush1.bf16.msra.mxu0 0
    %73 = vmatprep.subr.bf16.mxu0 0
    %74 = vmatpush1.bf16.msra.mxu0 %v57
    %75 = vmatprep.subr.bf16.mxu0 0
    %76 = vmatpush2.bf16.msra.mxu0 0
    %77 = vmatprep.subr.bf16.mxu0 0
    %78 = vmatpush2.bf16.msra.mxu0 0
    %79 = vmatprep.subr.bf16.mxu0 0
    %80 = vmatpush2.bf16.msra.mxu0 0
    %81 = vmatprep.subr.bf16.mxu0 0
    %82 = vmatpush2.bf16.msra.mxu0 0
    %83 = vmatprep.subr.bf16.mxu0 0
    %84 = vmatpush2.bf16.msra.mxu0 0
    %85 = vmatprep.subr.bf16.mxu0 0
    %86 = vmatpush2.bf16.msra.mxu0 0
    %87 = vmatprep.subr.bf16.mxu0 0
    %88 = vmatpush2.bf16.msra.mxu0 0
    %89 = vmatprep.subr.bf16.mxu0 0
    %90 = vmatpush2.bf16.msra.mxu0 0
    %91 = vmatprep.mubr.bf16.mxu0 0
    %92 = vmatmul.mubr.bf16.gmra.mxu0 %v53
    %v93 = vpop.f32.mrf.mxu0
    %v94 = vadd.f32 0.0, %v93
    %v95 = vpop.f32.mrf.mxu0
    %v96 = vpop.f32.mrf.mxu0
    %v97 = vadd.f32 0.0, %v96
    %v98 = vpop.f32.mrf.mxu0
    %99 = vdwg.mxu0
    %v104 = vunpack.c.l.b16 %v46
    %v105 = vunpack.c.l.b16 %v47
    %v106 = vunpack.c.l.b16 %v48
    %v107 = vunpack.c.l.b16 %v49
    %v108 = vpack.c.b16 %v105, %v104
    %v109 = vpack.c.b16 %v107, %v106
    %vm112 = vcmask 261120
    %v114 = vsel %vm112, %v42, 0
    %116 = vmatprep.subr.bf16.mxu0 0
    %117 = vmatpush1.bf16.msra.mxu0 0
    %118 = vmatprep.subr.bf16.mxu0 0
    %119 = vmatpush1.bf16.msra.mxu0 0
    %120 = vmatprep.subr.bf16.mxu0 0
    %121 = vmatpush1.bf16.msra.mxu0 0
    %122 = vmatprep.subr.bf16.mxu0 0
    %123 = vmatpush1.bf16.msra.mxu0 0
    %124 = vmatprep.subr.bf16.mxu0 0
    %125 = vmatpush1.bf16.msra.mxu0 0
    %126 = vmatprep.subr.bf16.mxu0 0
    %127 = vmatpush1.bf16.msra.mxu0 0
    %128 = vmatprep.subr.bf16.mxu0 0
    %129 = vmatpush1.bf16.msra.mxu0 %v109
    %130 = vmatprep.subr.bf16.mxu0 0
    %131 = vmatpush1.bf16.msra.mxu0 %v108
    %132 = vmatprep.subr.bf16.mxu0 0
    %133 = vmatpush2.bf16.msra.mxu0 0
    %134 = vmatprep.subr.bf16.mxu0 0
    %135 = vmatpush2.bf16.msra.mxu0 0
    %136 = vmatprep.subr.bf16.mxu0 0
    %137 = vmatpush2.bf16.msra.mxu0 0
    %138 = vmatprep.subr.bf16.mxu0 0
    %139 = vmatpush2.bf16.msra.mxu0 0
    %140 = vmatprep.subr.bf16.mxu0 0
    %141 = vmatpush2.bf16.msra.mxu0 0
    %142 = vmatprep.subr.bf16.mxu0 0
    %143 = vmatpush2.bf16.msra.mxu0 0
    %144 = vmatprep.subr.bf16.mxu0 0
    %145 = vmatpush2.bf16.msra.mxu0 0
    %146 = vmatprep.subr.bf16.mxu0 0
    %147 = vmatpush2.bf16.msra.mxu0 0
    %148 = vmatprep.mubr.bf16.mxu0 0
    %149 = vmatmul.mubr.bf16.gmra.mxu0 %v114
    %v150 = vpop.f32.mrf.mxu0
    %v151 = vadd.f32 %v94, %v150
    %v152 = vpop.f32.mrf.mxu0
    %v153 = vpop.f32.mrf.mxu0
    %v154 = vadd.f32 %v97, %v153
    %v155 = vpop.f32.mrf.mxu0
    %156 = vdwg.mxu0
    %v157 = vld [vmem:[%s4] sm:$0x1]
    %v159 = vlaneseq
    %v160 = vshrl.u32 %v159, 7
    %v161 = vsub.s32 0, %v160
    %v162 = vrot.slane %v157, %v161
    %v164 = vadd.f32 %v151, %v162
    %v165 = vadd.f32 %v154, %v162
    %v166 = vmax.f32 %v164, 0.0
    %v167 = vmax.f32 %v165, 0.0
    %v168 = vpack.c.bf16 %v167, %v166
    %v169 = vld [vmem:[%s5] sm:$0xf]
    %v170 = vld [vmem:[%s5 + $0x4] sm:$0xf]
    %v171 = vld [vmem:[%s5 + $0x8] sm:$0xf]
    %v172 = vld [vmem:[%s5 + $0xc] sm:$0xf]
    %v173 = vld [vmem:[%s5 + $0x10] sm:$0xf]
    %v174 = vld [vmem:[%s5 + $0x14] sm:$0xf]
    %v175 = vld [vmem:[%s5 + $0x18] sm:$0xf]
    %v176 = vld [vmem:[%s5 + $0x1c] sm:$0xf]
    %v177 = vld [vmem:[%s5 + $0x20] sm:$0xf]
    %v178 = vld [vmem:[%s5 + $0x24] sm:$0xf]
    %v179 = vld [vmem:[%s5 + $0x28] sm:$0xf]
    %v180 = vld [vmem:[%s5 + $0x2c] sm:$0xf]
    %v181 = vld [vmem:[%s5 + $0x30] sm:$0xf]
    %v182 = vld [vmem:[%s5 + $0x34] sm:$0xf]
    %v183 = vld [vmem:[%s5 + $0x38] sm:$0xf]
    %v184 = vld [vmem:[%s5 + $0x3c] sm:$0xf]
    %v185 = vld [vmem:[%s6] sm:$0x1]
    %v187 = vlaneseq
    %v188 = vshrl.u32 %v187, 7
    %v189 = vsub.s32 0, %v188
    %v190 = vrot.slane %v185, %v189
    %v208 = vunpack.c.l.b16 %v169
    %v209 = vunpack.c.l.b16 %v170
    %v210 = vunpack.c.l.b16 %v171
    %v211 = vunpack.c.l.b16 %v172
    %v212 = vunpack.c.l.b16 %v173
    %v213 = vunpack.c.l.b16 %v174
    %v214 = vunpack.c.l.b16 %v175
    %v215 = vunpack.c.l.b16 %v176
    %v216 = vunpack.c.l.b16 %v177
    %v217 = vunpack.c.l.b16 %v178
    %v218 = vunpack.c.l.b16 %v179
    %v219 = vunpack.c.l.b16 %v180
    %v220 = vunpack.c.l.b16 %v181
    %v221 = vunpack.c.l.b16 %v182
    %v222 = vunpack.c.l.b16 %v183
    %v223 = vunpack.c.l.b16 %v184
    %v224 = vpack.c.b16 %v209, %v208
    %v225 = vpack.c.b16 %v211, %v210
    %v226 = vpack.c.b16 %v213, %v212
    %v227 = vpack.c.b16 %v215, %v214
    %v228 = vpack.c.b16 %v217, %v216
    %v229 = vpack.c.b16 %v219, %v218
    %v230 = vpack.c.b16 %v221, %v220
    %v231 = vpack.c.b16 %v223, %v222
    %240 = vmatprep.subr.bf16.mxu0 0
    %241 = vmatpush1.bf16.msra.mxu0 %v231
    %242 = vmatprep.subr.bf16.mxu0 0
    %243 = vmatpush1.bf16.msra.mxu0 %v230
    %244 = vmatprep.subr.bf16.mxu0 0
    %245 = vmatpush1.bf16.msra.mxu0 %v229
    %246 = vmatprep.subr.bf16.mxu0 0
    %247 = vmatpush1.bf16.msra.mxu0 %v228
    %248 = vmatprep.subr.bf16.mxu0 0
    %249 = vmatpush1.bf16.msra.mxu0 %v227
    %250 = vmatprep.subr.bf16.mxu0 0
    %251 = vmatpush1.bf16.msra.mxu0 %v226
    %252 = vmatprep.subr.bf16.mxu0 0
    %253 = vmatpush1.bf16.msra.mxu0 %v225
    %254 = vmatprep.subr.bf16.mxu0 0
    %255 = vmatpush1.bf16.msra.mxu0 %v224
    %256 = vmatprep.subr.bf16.mxu0 0
    %257 = vmatpush2.bf16.msra.mxu0 0
    %258 = vmatprep.subr.bf16.mxu0 0
    %259 = vmatpush2.bf16.msra.mxu0 0
    %260 = vmatprep.subr.bf16.mxu0 0
    %261 = vmatpush2.bf16.msra.mxu0 0
    %262 = vmatprep.subr.bf16.mxu0 0
    %263 = vmatpush2.bf16.msra.mxu0 0
    %264 = vmatprep.subr.bf16.mxu0 0
    %265 = vmatpush2.bf16.msra.mxu0 0
    %266 = vmatprep.subr.bf16.mxu0 0
    %267 = vmatpush2.bf16.msra.mxu0 0
    %268 = vmatprep.subr.bf16.mxu0 0
    %269 = vmatpush2.bf16.msra.mxu0 0
    %270 = vmatprep.subr.bf16.mxu0 0
    %271 = vmatpush2.bf16.msra.mxu0 0
    %272 = vmatprep.mubr.bf16.mxu0 0
    %273 = vmatmul.mubr.bf16.gmra.mxu0 %v168
    %v274 = vpop.f32.mrf.mxu0
    %v275 = vadd.f32 %v190, %v274
    %v276 = vpop.f32.mrf.mxu0
    %v277 = vpop.f32.mrf.mxu0
    %v278 = vadd.f32 %v190, %v277
    %v279 = vpop.f32.mrf.mxu0
    %280 = vdwg.mxu0
    %v281 = vmax.f32 %v275, 0.0
    %v282 = vmax.f32 %v278, 0.0
    %v283 = vpack.c.bf16 %v282, %v281
    %v284 = vld [vmem:[%s7] sm:$0xf]
    %v285 = vld [vmem:[%s7 + $0x4] sm:$0xf]
    %v286 = vld [vmem:[%s7 + $0x8] sm:$0xf]
    %v287 = vld [vmem:[%s7 + $0xc] sm:$0xf]
    %v288 = vld [vmem:[%s7 + $0x10] sm:$0xf]
    %v289 = vld [vmem:[%s7 + $0x14] sm:$0xf]
    %v290 = vld [vmem:[%s7 + $0x18] sm:$0xf]
    %v291 = vld [vmem:[%s7 + $0x1c] sm:$0xf]
    %v292 = vld [vmem:[%s7 + $0x20] sm:$0xf]
    %v293 = vld [vmem:[%s7 + $0x24] sm:$0xf]
    %v294 = vld [vmem:[%s7 + $0x28] sm:$0xf]
    %v295 = vld [vmem:[%s7 + $0x2c] sm:$0xf]
    %v296 = vld [vmem:[%s7 + $0x30] sm:$0xf]
    %v297 = vld [vmem:[%s7 + $0x34] sm:$0xf]
    %v298 = vld [vmem:[%s7 + $0x38] sm:$0xf]
    %v299 = vld [vmem:[%s7 + $0x3c] sm:$0xf]
    %v300 = vld [vmem:[%s8] sm:$0x1]
    %v302 = vlaneseq
    %v303 = vshrl.u32 %v302, 7
    %v304 = vsub.s32 0, %v303
    %v305 = vrot.slane %v300, %v304
    %v323 = vunpack.c.l.b16 %v284
    %v324 = vunpack.c.l.b16 %v285
    %v325 = vunpack.c.l.b16 %v286
    %v326 = vunpack.c.l.b16 %v287
    %v327 = vunpack.c.l.b16 %v288
    %v328 = vunpack.c.l.b16 %v289
    %v329 = vunpack.c.l.b16 %v290
    %v330 = vunpack.c.l.b16 %v291
    %v331 = vunpack.c.l.b16 %v292
    %v332 = vunpack.c.l.b16 %v293
    %v333 = vunpack.c.l.b16 %v294
    %v334 = vunpack.c.l.b16 %v295
    %v335 = vunpack.c.l.b16 %v296
    %v336 = vunpack.c.l.b16 %v297
    %v337 = vunpack.c.l.b16 %v298
    %v338 = vunpack.c.l.b16 %v299
    %v339 = vpack.c.b16 %v324, %v323
    %v340 = vpack.c.b16 %v326, %v325
    %v341 = vpack.c.b16 %v328, %v327
    %v342 = vpack.c.b16 %v330, %v329
    %v343 = vpack.c.b16 %v332, %v331
    %v344 = vpack.c.b16 %v334, %v333
    %v345 = vpack.c.b16 %v336, %v335
    %v346 = vpack.c.b16 %v338, %v337
    %355 = vmatprep.subr.bf16.mxu0 0
    %356 = vmatpush1.bf16.msra.mxu0 %v346
    %357 = vmatprep.subr.bf16.mxu0 0
    %358 = vmatpush1.bf16.msra.mxu0 %v345
    %359 = vmatprep.subr.bf16.mxu0 0
    %360 = vmatpush1.bf16.msra.mxu0 %v344
    %361 = vmatprep.subr.bf16.mxu0 0
    %362 = vmatpush1.bf16.msra.mxu0 %v343
    %363 = vmatprep.subr.bf16.mxu0 0
    %364 = vmatpush1.bf16.msra.mxu0 %v342
    %365 = vmatprep.subr.bf16.mxu0 0
    %366 = vmatpush1.bf16.msra.mxu0 %v341
    %367 = vmatprep.subr.bf16.mxu0 0
    %368 = vmatpush1.bf16.msra.mxu0 %v340
    %369 = vmatprep.subr.bf16.mxu0 0
    %370 = vmatpush1.bf16.msra.mxu0 %v339
    %371 = vmatprep.subr.bf16.mxu0 0
    %372 = vmatpush2.bf16.msra.mxu0 0
    %373 = vmatprep.subr.bf16.mxu0 0
    %374 = vmatpush2.bf16.msra.mxu0 0
    %375 = vmatprep.subr.bf16.mxu0 0
    %376 = vmatpush2.bf16.msra.mxu0 0
    %377 = vmatprep.subr.bf16.mxu0 0
    %378 = vmatpush2.bf16.msra.mxu0 0
    %379 = vmatprep.subr.bf16.mxu0 0
    %380 = vmatpush2.bf16.msra.mxu0 0
    %381 = vmatprep.subr.bf16.mxu0 0
    %382 = vmatpush2.bf16.msra.mxu0 0
    %383 = vmatprep.subr.bf16.mxu0 0
    %384 = vmatpush2.bf16.msra.mxu0 0
    %385 = vmatprep.subr.bf16.mxu0 0
    %386 = vmatpush2.bf16.msra.mxu0 0
    %387 = vmatprep.mubr.bf16.mxu0 0
    %388 = vmatmul.mubr.bf16.gmra.mxu0 %v283
    %v389 = vpop.f32.mrf.mxu0
    %v390 = vadd.f32 %v305, %v389
    %v391 = vpop.f32.mrf.mxu0
    %v392 = vpop.f32.mrf.mxu0
    %v393 = vadd.f32 %v305, %v392
    %v394 = vpop.f32.mrf.mxu0
    %395 = vdwg.mxu0
    %v396 = vmax.f32 %v390, 0.0
    %v397 = vmax.f32 %v393, 0.0
    %v398 = vpack.c.bf16 %v397, %v396
    %v399 = vld [vmem:[%s9] sm:$0xf]
    %v400 = vld [vmem:[%s9 + $0x4] sm:$0xf]
    %v401 = vld [vmem:[%s9 + $0x8] sm:$0xf]
    %v402 = vld [vmem:[%s9 + $0xc] sm:$0xf]
    %v403 = vld [vmem:[%s9 + $0x10] sm:$0xf]
    %v404 = vld [vmem:[%s9 + $0x14] sm:$0xf]
    %v405 = vld [vmem:[%s9 + $0x18] sm:$0xf]
    %v406 = vld [vmem:[%s9 + $0x1c] sm:$0xf]
    %v407 = vld [vmem:[%s9 + $0x20] sm:$0xf]
    %v408 = vld [vmem:[%s9 + $0x24] sm:$0xf]
    %v409 = vld [vmem:[%s9 + $0x28] sm:$0xf]
    %v410 = vld [vmem:[%s9 + $0x2c] sm:$0xf]
    %v411 = vld [vmem:[%s9 + $0x30] sm:$0xf]
    %v412 = vld [vmem:[%s9 + $0x34] sm:$0xf]
    %v413 = vld [vmem:[%s9 + $0x38] sm:$0xf]
    %v414 = vld [vmem:[%s9 + $0x3c] sm:$0xf]
    %v415 = vld [vmem:[%s10] sm:$0x1]
    %v417 = vlaneseq
    %v418 = vshrl.u32 %v417, 7
    %v419 = vsub.s32 0, %v418
    %v420 = vrot.slane %v415, %v419
    %v438 = vunpack.c.l.b16 %v399
    %v439 = vunpack.c.l.b16 %v400
    %v440 = vunpack.c.l.b16 %v401
    %v441 = vunpack.c.l.b16 %v402
    %v442 = vunpack.c.l.b16 %v403
    %v443 = vunpack.c.l.b16 %v404
    %v444 = vunpack.c.l.b16 %v405
    %v445 = vunpack.c.l.b16 %v406
    %v446 = vunpack.c.l.b16 %v407
    %v447 = vunpack.c.l.b16 %v408
    %v448 = vunpack.c.l.b16 %v409
    %v449 = vunpack.c.l.b16 %v410
    %v450 = vunpack.c.l.b16 %v411
    %v451 = vunpack.c.l.b16 %v412
    %v452 = vunpack.c.l.b16 %v413
    %v453 = vunpack.c.l.b16 %v414
    %v454 = vpack.c.b16 %v439, %v438
    %v455 = vpack.c.b16 %v441, %v440
    %v456 = vpack.c.b16 %v443, %v442
    %v457 = vpack.c.b16 %v445, %v444
    %v458 = vpack.c.b16 %v447, %v446
    %v459 = vpack.c.b16 %v449, %v448
    %v460 = vpack.c.b16 %v451, %v450
    %v461 = vpack.c.b16 %v453, %v452
    %470 = vmatprep.subr.bf16.mxu0 0
    %471 = vmatpush1.bf16.msra.mxu0 %v461
    %472 = vmatprep.subr.bf16.mxu0 0
    %473 = vmatpush1.bf16.msra.mxu0 %v460
    %474 = vmatprep.subr.bf16.mxu0 0
    %475 = vmatpush1.bf16.msra.mxu0 %v459
    %476 = vmatprep.subr.bf16.mxu0 0
    %477 = vmatpush1.bf16.msra.mxu0 %v458
    %478 = vmatprep.subr.bf16.mxu0 0
    %479 = vmatpush1.bf16.msra.mxu0 %v457
    %480 = vmatprep.subr.bf16.mxu0 0
    %481 = vmatpush1.bf16.msra.mxu0 %v456
    %482 = vmatprep.subr.bf16.mxu0 0
    %483 = vmatpush1.bf16.msra.mxu0 %v455
    %484 = vmatprep.subr.bf16.mxu0 0
    %485 = vmatpush1.bf16.msra.mxu0 %v454
    %486 = vmatprep.subr.bf16.mxu0 0
    %487 = vmatpush2.bf16.msra.mxu0 0
    %488 = vmatprep.subr.bf16.mxu0 0
    %489 = vmatpush2.bf16.msra.mxu0 0
    %490 = vmatprep.subr.bf16.mxu0 0
    %491 = vmatpush2.bf16.msra.mxu0 0
    %492 = vmatprep.subr.bf16.mxu0 0
    %493 = vmatpush2.bf16.msra.mxu0 0
    %494 = vmatprep.subr.bf16.mxu0 0
    %495 = vmatpush2.bf16.msra.mxu0 0
    %496 = vmatprep.subr.bf16.mxu0 0
    %497 = vmatpush2.bf16.msra.mxu0 0
    %498 = vmatprep.subr.bf16.mxu0 0
    %499 = vmatpush2.bf16.msra.mxu0 0
    %500 = vmatprep.subr.bf16.mxu0 0
    %501 = vmatpush2.bf16.msra.mxu0 0
    %502 = vmatprep.mubr.bf16.mxu0 0
    %503 = vmatmul.mubr.bf16.gmra.mxu0 %v398
    %v504 = vpop.f32.mrf.mxu0
    %v505 = vadd.f32 %v420, %v504
    %v506 = vpop.f32.mrf.mxu0
    %v507 = vpop.f32.mrf.mxu0
    %v508 = vadd.f32 %v420, %v507
    %v509 = vpop.f32.mrf.mxu0
    %510 = vdwg.mxu0
    %511 = vst [vmem:[#allocation2] sm:$0xff] %v505
    %512 = vst [vmem:[#allocation2 + $0x8] sm:$0xff] %v508
    // Predicated region
    $region46: #{transition_model_forward.1} parent=1 // pred_check
      _
    $region47: #{transition_model_forward.1} parent=1 // pred_check_branch
      %514 = sbr.rel (0) target = $region49
    $region48: #{transition_model_forward.1} parent=1 // pred_region
      %s516 = ssub.s32 256, 256
      %517 = vsyncadd [#allocation3], %s516
      %s518 = sshll.u32 [#allocation2], 4
      %s519 = int_to_ptr.vmem [resolvable:$true] %s518
      %524 = dma.vmem_to_hbm [thread:$0]  %s519, 256, %s11, [#allocation3], 128, 128, 8
    $region49: #{transition_model_forward.1} parent=1 // pred_fallthru
      _
    // Predicated region
    $region50: #{transition_model_forward.1} parent=1 // pred_check
      _
    $region51: #{transition_model_forward.1} parent=1 // pred_check_branch
      %526 = sbr.rel (0) target = $region53
    $region52: #{transition_model_forward.1} parent=1 // pred_region
      %527 = dma.done [#allocation3], 256
    $region53: #{transition_model_forward.1} parent=1 // pred_fallthru
      _
    %528 = vsyncpa [#allocation3], 1

</llo_original>
